<compile_context>
chip_gen: v7x
topology: tpu7x:2x2x1
jax: 0.10.0
libtpu: 0.0.40
codegen_flags: <defaults>
</compile_context>

<pallas_src>
import jax
import jax.numpy as jnp
from jax.experimental import pallas as pl
from jax.experimental.pallas import tpu as pltpu

LANE = 128
SUBLANE = 8


def _net_kernel(x_ref, w1_ref, w2_ref, w3_ref, w4_ref,
                c1_ref, c2_ref, c3_ref, out_ref):
    # x_ref: (TM, 128)  w*_ref: (128, 128)  c*_ref: (1, 128)  out_ref: (TM, 128)
    h = jnp.dot(x_ref[...], w1_ref[...], preferred_element_type=jnp.float32)
    h = c1_ref[...] * jnp.maximum(h, 0.0)          # ModulationReLU 1 (row-broadcast)

    h = jnp.dot(h, w2_ref[...], preferred_element_type=jnp.float32)
    h = c2_ref[...] * jnp.maximum(h, 0.0)          # ModulationReLU 2

    h = jnp.dot(h, w3_ref[...], preferred_element_type=jnp.float32)
    h = c3_ref[...] * jnp.maximum(h, 0.0)          # ModulationReLU 3

    out_ref[...] = jnp.dot(h, w4_ref[...],
                           preferred_element_type=jnp.float32).astype(out_ref.dtype)
    # TODO(synk): softmax=True branch (returns softmax(h3_activated)) is not
    # exercised by the default config; only the softmax=False path is kernelized.


def _round_up(n, m):
    return ((n + m - 1) // m) * m


def _pad2d(a, rows, cols):
    return jnp.pad(a, ((0, rows - a.shape[0]), (0, cols - a.shape[1])))


def net_forward(x, w1, w2, w3, w4, c1=None, c2=None, c3=None, *, tm=512):
    """Forward pass of Net.

    x : (B, ...) — flattened internally (nn.Flatten equivalent).
    w1..w4 : weights already transposed to (in_features, out_features).
    c1..c3 : optional control-signal rows of shape (hidden,) or (1, hidden);
             default is the reset state (ones).
    Returns (B, output_size) float32.
    """
    B = x.shape[0]
    x2 = x.reshape(B, -1).astype(jnp.float32)          # nn.Flatten
    in_size = x2.shape[1]
    hid = w1.shape[1]
    out_size = w4.shape[1]

    Kp = _round_up(in_size, LANE)      # padded input-feature width
    Hp = _round_up(hid, LANE)          # padded hidden width
    Np = _round_up(out_size, LANE)     # padded output width (lane-dense store)

    # Batch tiling: >=512-row tiles when the batch is large, otherwise one
    # sublane-aligned tile.  Fits comfortably in the v7x 32 MiB scoped VMEM
    # default (f32, 128-wide, double-buffered).
    tm_eff = min(tm, max(SUBLANE, _round_up(B, SUBLANE)))
    Bp = _round_up(B, tm_eff)

    # Zero-pad operands to lane-dense shapes (zeros are inert through the
    # relu/modulation chain, so real columns are unchanged).
    x_p = _pad2d(x2, Bp, Kp)
    w1_p = _pad2d(w1.astype(jnp.float32), Kp, Hp)
    w2_p = _pad2d(w2.astype(jnp.float32), Hp, Hp)
    w3_p = _pad2d(w3.astype(jnp.float32), Hp, Hp)
    w4_p = _pad2d(w4.astype(jnp.float32), Hp, Np)

    def _prep_c(c):
        if c is None:
            c = jnp.ones((hid,), jnp.float32)          # reset_control_signals
        c = jnp.asarray(c, jnp.float32).reshape(1, -1)
        return _pad2d(c, 1, Hp)

    c1_p, c2_p, c3_p = _prep_c(c1), _prep_c(c2), _prep_c(c3)

    grid = (Bp // tm_eff,)
    batch_spec = lambda cols: pl.BlockSpec((tm_eff, cols), lambda i: (i, 0))
    const_spec = lambda shape: pl.BlockSpec(shape, lambda i: (0, 0))

    out_padded = pl.pallas_call(
        _net_kernel,
        out_shape=jax.ShapeDtypeStruct((Bp, Np), jnp.float32),
        grid=grid,
        in_specs=[
            batch_spec(Kp),                 # x tile streams with the grid
            const_spec((Kp, Hp)),           # weights: VMEM-resident, DMA'd once
            const_spec((Hp, Hp)),
            const_spec((Hp, Hp)),
            const_spec((Hp, Np)),
            const_spec((1, Hp)),            # control-signal rows (broadcast)
            const_spec((1, Hp)),
            const_spec((1, Hp)),
        ],
        out_specs=batch_spec(Np),           # lane-dense (TM, 128) store
        compiler_params=pltpu.CompilerParams(
            dimension_semantics=("parallel",)),   # shards across v7x's 2 TCs
    )(x_p, w1_p, w2_p, w3_p, w4_p, c1_p, c2_p, c3_p)

    return out_padded[:B, :out_size]


def make_params(key, input_size=8, hidden_size=20, output_size=2):
    """Deterministic init mimicking nn.Linear's Kaiming-uniform (bias=False).
    Weights are returned already transposed to (in, out)."""
    ks = jax.random.split(key, 4)

    def linear_w(k, fan_in, fan_out):
        bound = 1.0 / jnp.sqrt(fan_in)
        # torch stores (out, in); we store the transpose (in, out).
        return jax.random.uniform(k, (fan_in, fan_out), jnp.float32,
                                  minval=-bound, maxval=bound)

    w1 = linear_w(ks[0], input_size, hidden_size)
    w2 = linear_w(ks[1], hidden_size, hidden_size)
    w3 = linear_w(ks[2], hidden_size, hidden_size)
    w4 = linear_w(ks[3], hidden_size, output_size)
    return w1, w2, w3, w4


def _reference(x, w1, w2, w3, w4, c1, c2, c3):
    x = x.reshape(x.shape[0], -1)
    mrelu = lambda h, c: c * jnp.maximum(h, 0.0)
    h = mrelu(x @ w1, c1)
    h = mrelu(h @ w2, c2)
    h = mrelu(h @ w3, c3)
    return h @ w4


if __name__ == "__main__":
    input_size, hidden_size, output_size = 8, 20, 2
    key = jax.random.PRNGKey(0)
    k_x, k_p, k_b = jax.random.split(key, 3)

    w1, w2, w3, w4 = make_params(k_p, input_size, hidden_size, output_size)
    ones_c = jnp.ones((hidden_size,), jnp.float32)   # reset_control_signals state

    # --- Small example matching the module: (batch=2, 2, 2, 2) -> flatten (2, 8)
    x_small = jax.random.normal(k_x, (2, 2, 2, 2), jnp.float32)
    out = net_forward(x_small, w1, w2, w3, w4)
    out = jax.block_until_ready(out)
    ref = _reference(x_small, w1, w2, w3, w4, ones_c, ones_c, ones_c)
    assert out.shape == (2, output_size)
    assert jnp.allclose(out, ref, atol=1e-5, rtol=1e-5)

    # --- Larger batch exercising the multi-step ("parallel") batch grid.
    x_big = jax.random.normal(k_b, (1024, input_size), jnp.float32)
    out_big = jax.block_until_ready(net_forward(x_big, w1, w2, w3, w4, tm=512))
    ref_big = _reference(x_big, w1, w2, w3, w4, ones_c, ones_c, ones_c)
    assert out_big.shape == (1024, output_size)
    assert jnp.allclose(out_big, ref_big, atol=1e-4, rtol=1e-4)

    print("KERNEL_OK")
</pallas_src>

<mosaic_0001>
module attributes {stable_mosaic.version = 11 : i64} {
  func.func @_net_kernel(%arg0: i32, %arg1: memref<8x128xf32, #tpu.memory_space<vmem>>, %arg2: memref<128x128xf32, #tpu.memory_space<vmem>>, %arg3: memref<128x128xf32, #tpu.memory_space<vmem>>, %arg4: memref<128x128xf32, #tpu.memory_space<vmem>>, %arg5: memref<128x128xf32, #tpu.memory_space<vmem>>, %arg6: memref<1x128xf32, #tpu.memory_space<vmem>>, %arg7: memref<1x128xf32, #tpu.memory_space<vmem>>, %arg8: memref<1x128xf32, #tpu.memory_space<vmem>>, %arg9: memref<8x128xf32, #tpu.memory_space<vmem>>) attributes {dimension_semantics = [#tpu.dimension_semantics<parallel>], iteration_bounds = array<i64: 1>, scalar_prefetch = 0 : i64, scratch_operands = 0 : i64, tpu.core_type = #tpu.core_type<tc>, window_params = [{transform_indices = @transform_0, window_bounds = array<i64: 8, 128>}, {pipeline_mode = #tpu.pipeline_mode<synchronous>, transform_indices = @transform_1, window_bounds = array<i64: 128, 128>}, {pipeline_mode = #tpu.pipeline_mode<synchronous>, transform_indices = @transform_2, window_bounds = array<i64: 128, 128>}, {pipeline_mode = #tpu.pipeline_mode<synchronous>, transform_indices = @transform_3, window_bounds = array<i64: 128, 128>}, {pipeline_mode = #tpu.pipeline_mode<synchronous>, transform_indices = @transform_4, window_bounds = array<i64: 128, 128>}, {pipeline_mode = #tpu.pipeline_mode<synchronous>, transform_indices = @transform_5, window_bounds = array<i64: 1, 128>}, {pipeline_mode = #tpu.pipeline_mode<synchronous>, transform_indices = @transform_6, window_bounds = array<i64: 1, 128>}, {pipeline_mode = #tpu.pipeline_mode<synchronous>, transform_indices = @transform_7, window_bounds = array<i64: 1, 128>}, {transform_indices = @transform_8, window_bounds = array<i64: 8, 128>}]} {
    %c0 = arith.constant 0 : index
    %c0_0 = arith.constant 0 : index
    %0 = vector.load %arg1[%c0, %c0_0] : memref<8x128xf32, #tpu.memory_space<vmem>>, vector<8x128xf32>
    %c0_1 = arith.constant 0 : index
    %c0_2 = arith.constant 0 : index
    %1 = vector.load %arg2[%c0_1, %c0_2] : memref<128x128xf32, #tpu.memory_space<vmem>>, vector<128x128xf32>
    %cst = arith.constant dense<0.000000e+00> : vector<8x128xf32>
    %2 = tpu.matmul %0, %1, %cst {dimension_numbers = #tpu.dot_dimension_numbers<[1], [0], [0], [1], [0, 0, 1, 1], [], []>} : vector<8x128xf32>, vector<128x128xf32>, vector<8x128xf32> -> vector<8x128xf32>
    %c0_3 = arith.constant 0 : index
    %c0_4 = arith.constant 0 : index
    %3 = vector.load %arg6[%c0_3, %c0_4] : memref<1x128xf32, #tpu.memory_space<vmem>>, vector<1x128xf32>
    %cst_5 = arith.constant 0.000000e+00 : f32
    %4 = vector.broadcast %cst_5 : f32 to vector<8x128xf32>
    %5 = arith.maximumf %2, %4 : vector<8x128xf32>
    %6 = vector.broadcast %3 : vector<1x128xf32> to vector<8x128xf32>
    %7 = arith.mulf %6, %5 : vector<8x128xf32>
    %c0_6 = arith.constant 0 : index
    %c0_7 = arith.constant 0 : index
    %8 = vector.load %arg3[%c0_6, %c0_7] : memref<128x128xf32, #tpu.memory_space<vmem>>, vector<128x128xf32>
    %cst_8 = arith.constant dense<0.000000e+00> : vector<8x128xf32>
    %9 = tpu.matmul %7, %8, %cst_8 {dimension_numbers = #tpu.dot_dimension_numbers<[1], [0], [0], [1], [0, 0, 1, 1], [], []>} : vector<8x128xf32>, vector<128x128xf32>, vector<8x128xf32> -> vector<8x128xf32>
    %c0_9 = arith.constant 0 : index
    %c0_10 = arith.constant 0 : index
    %10 = vector.load %arg7[%c0_9, %c0_10] : memref<1x128xf32, #tpu.memory_space<vmem>>, vector<1x128xf32>
    %cst_11 = arith.constant 0.000000e+00 : f32
    %11 = vector.broadcast %cst_11 : f32 to vector<8x128xf32>
    %12 = arith.maximumf %9, %11 : vector<8x128xf32>
    %13 = vector.broadcast %10 : vector<1x128xf32> to vector<8x128xf32>
    %14 = arith.mulf %13, %12 : vector<8x128xf32>
    %c0_12 = arith.constant 0 : index
    %c0_13 = arith.constant 0 : index
    %15 = vector.load %arg4[%c0_12, %c0_13] : memref<128x128xf32, #tpu.memory_space<vmem>>, vector<128x128xf32>
    %cst_14 = arith.constant dense<0.000000e+00> : vector<8x128xf32>
    %16 = tpu.matmul %14, %15, %cst_14 {dimension_numbers = #tpu.dot_dimension_numbers<[1], [0], [0], [1], [0, 0, 1, 1], [], []>} : vector<8x128xf32>, vector<128x128xf32>, vector<8x128xf32> -> vector<8x128xf32>
    %c0_15 = arith.constant 0 : index
    %c0_16 = arith.constant 0 : index
    %17 = vector.load %arg8[%c0_15, %c0_16] : memref<1x128xf32, #tpu.memory_space<vmem>>, vector<1x128xf32>
    %cst_17 = arith.constant 0.000000e+00 : f32
    %18 = vector.broadcast %cst_17 : f32 to vector<8x128xf32>
    %19 = arith.maximumf %16, %18 : vector<8x128xf32>
    %20 = vector.broadcast %17 : vector<1x128xf32> to vector<8x128xf32>
    %21 = arith.mulf %20, %19 : vector<8x128xf32>
    %c0_18 = arith.constant 0 : index
    %c0_19 = arith.constant 0 : index
    %22 = vector.load %arg5[%c0_18, %c0_19] : memref<128x128xf32, #tpu.memory_space<vmem>>, vector<128x128xf32>
    %cst_20 = arith.constant dense<0.000000e+00> : vector<8x128xf32>
    %23 = tpu.matmul %21, %22, %cst_20 {dimension_numbers = #tpu.dot_dimension_numbers<[1], [0], [0], [1], [0, 0, 1, 1], [], []>} : vector<8x128xf32>, vector<128x128xf32>, vector<8x128xf32> -> vector<8x128xf32>
    %c0_21 = arith.constant 0 : index
    %c0_22 = arith.constant 0 : index
    %24 = vector.load %arg9[%c0_21, %c0_22] : memref<8x128xf32, #tpu.memory_space<vmem>>, vector<8x128xf32>
    tpu.vector_store %arg9[%c0_21, %c0_22], %23 {strides = array<i32>} : memref<8x128xf32, #tpu.memory_space<vmem>>, vector<8x128xf32>,
    return
  }
  func.func @transform_0(%arg0: i32) -> (i32, i32) {
    %c0_i32 = arith.constant 0 : i32
    %c0_i32_0 = arith.constant 0 : i32
    return %arg0, %c0_i32 : i32, i32
  }
  func.func @transform_1(%arg0: i32) -> (i32, i32) {
    %c0_i32 = arith.constant 0 : i32
    %c0_i32_0 = arith.constant 0 : i32
    %c0_i32_1 = arith.constant 0 : i32
    return %c0_i32, %c0_i32_0 : i32, i32
  }
  func.func @transform_2(%arg0: i32) -> (i32, i32) {
    %c0_i32 = arith.constant 0 : i32
    %c0_i32_0 = arith.constant 0 : i32
    %c0_i32_1 = arith.constant 0 : i32
    return %c0_i32, %c0_i32_0 : i32, i32
  }
  func.func @transform_3(%arg0: i32) -> (i32, i32) {
    %c0_i32 = arith.constant 0 : i32
    %c0_i32_0 = arith.constant 0 : i32
    %c0_i32_1 = arith.constant 0 : i32
    return %c0_i32, %c0_i32_0 : i32, i32
  }
  func.func @transform_4(%arg0: i32) -> (i32, i32) {
    %c0_i32 = arith.constant 0 : i32
    %c0_i32_0 = arith.constant 0 : i32
    %c0_i32_1 = arith.constant 0 : i32
    return %c0_i32, %c0_i32_0 : i32, i32
  }
  func.func @transform_5(%arg0: i32) -> (i32, i32) {
    %c0_i32 = arith.constant 0 : i32
    %c0_i32_0 = arith.constant 0 : i32
    %c0_i32_1 = arith.constant 0 : i32
    return %c0_i32, %c0_i32_0 : i32, i32
  }
  func.func @transform_6(%arg0: i32) -> (i32, i32) {
    %c0_i32 = arith.constant 0 : i32
    %c0_i32_0 = arith.constant 0 : i32
    %c0_i32_1 = arith.constant 0 : i32
    return %c0_i32, %c0_i32_0 : i32, i32
  }
  func.func @transform_7(%arg0: i32) -> (i32, i32) {
    %c0_i32 = arith.constant 0 : i32
    %c0_i32_0 = arith.constant 0 : i32
    %c0_i32_1 = arith.constant 0 : i32
    return %c0_i32, %c0_i32_0 : i32, i32
  }
  func.func @transform_8(%arg0: i32) -> (i32, i32) {
    %c0_i32 = arith.constant 0 : i32
    %c0_i32_0 = arith.constant 0 : i32
    return %arg0, %c0_i32 : i32, i32
  }
}

</mosaic_0001>

<llo_original>
// kernel: tpu_custom_call.1
$region0: #{tpu_custom_call.1}
  #allocation0 [shape = 'u32[]', space=smem, size = 0x4, offset = 0x4, fixed_abs, tag = 'smem constant byte address 0x4 - core index']
  #allocation1 [shape = 'u32[144,128]{1,0:T(1,128)}', space=vmem, size = 0x12000, scoped, tag = 'internal scratch']
  %s0 = inlined_call_operand.hbm [shape: f32[8,128], index: 0, kind: input, shape index: {}]
  %s1 = inlined_call_operand.hbm [shape: f32[128,128], index: 1, kind: input, shape index: {}]
  %s2 = inlined_call_operand.hbm [shape: f32[128,128], index: 2, kind: input, shape index: {}]
  %s3 = inlined_call_operand.hbm [shape: f32[128,128], index: 3, kind: input, shape index: {}]
  %s4 = inlined_call_operand.hbm [shape: f32[128,128], index: 4, kind: input, shape index: {}]
  %s5 = inlined_call_operand.vmem [shape: f32[1,128], index: 5, kind: input, shape index: {}]
  %s6 = inlined_call_operand.vmem [shape: f32[1,128], index: 6, kind: input, shape index: {}]
  %s7 = inlined_call_operand.vmem [shape: f32[1,128], index: 7, kind: input, shape index: {}]
  %s8 = inlined_call_operand.hbm [shape: f32[8,128], index: 8, kind: output, shape index: {}]
  %s9 = sld [smem:[#allocation0]]
  $region62: #{tpu_custom_call.1} parent=0
    _
  %s11 = ssub.s32 1, %s9
  %s12 = scalar_select 0, %s11, %s9
  $region1: #{tpu_custom_call.1} parent=0
    #allocation2 [shape = 'u8[4096]{0}', space=vmem, size = 0x1000, scoped, tag = 'input window, operand 0, single buffered']
    #allocation3 [shape = 's32[1]{0}', space=sflag, size = 0x4, scoped, tag = 'scoped memory for tpu_custom_call.1']
    #allocation4 [shape = 's32[1]{0}', space=sflag, size = 0x4, scoped, tag = 'scoped memory for tpu_custom_call.1']
    #allocation5 [shape = 'u8[65536]{0}', space=vmem, size = 0x10000, scoped, tag = 'input window, operand 1, single buffered']
    #allocation6 [shape = 's32[1]{0}', space=sflag, size = 0x4, scoped, tag = 'scoped memory for tpu_custom_call.1']
    #allocation7 [shape = 'u8[65536]{0}', space=vmem, size = 0x10000, scoped, tag = 'input window, operand 2, single buffered']
    #allocation8 [shape = 'u8[65536]{0}', space=vmem, size = 0x10000, scoped, tag = 'input window, operand 3, single buffered']
    #allocation9 [shape = 's32[1]{0}', space=sflag, size = 0x4, scoped, tag = 'scoped memory for tpu_custom_call.1']
    #allocation10 [shape = 'u8[65536]{0}', space=vmem, size = 0x10000, scoped, tag = 'input window, operand 4, single buffered']
    #allocation11 [shape = 'u8[4096]{0}', space=vmem, size = 0x1000, scoped, tag = 'output window, operand 0, single buffered']
    %13 = vsyncpa [#allocation3], 0
    %14 = vsyncpa [#allocation6], 0
    %15 = vsyncpa [#allocation9], 0
    %16 = vsyncpa [#allocation4], 0
    // Predicated region
    $region2: #{tpu_custom_call.1} parent=1 // pred_check
      _
    $region3: #{tpu_custom_call.1} parent=1 // pred_check_branch
      %18 = sbr.rel (0) target = $region5
    $region4: #{tpu_custom_call.1} parent=1 // pred_region
      %s20 = ssub.s32 128, 128
      %21 = vsyncadd [#allocation3], %s20
      %s23 = sshll.u32 [#allocation2], 4
      %s24 = int_to_ptr.vmem [resolvable:$true] %s23
      %26 = dma.hbm_to_vmem [thread:$0]  %s0, 128, %s24, [#allocation3]
    $region5: #{tpu_custom_call.1} parent=1 // pred_fallthru
      _
    // Predicated region
    $region6: #{tpu_custom_call.1} parent=1 // pred_check
      _
    $region7: #{tpu_custom_call.1} parent=1 // pred_check_branch
      %28 = sbr.rel (0) target = $region9
    $region8: #{tpu_custom_call.1} parent=1 // pred_region
      %s30 = ssub.s32 2048, 2048
      %31 = vsyncadd [#allocation6], %s30
      %s32 = sshll.u32 [#allocation5], 4
      %s33 = int_to_ptr.vmem [resolvable:$true] %s32
      %38 = dma.hbm_to_vmem [thread:$0]  %s1, 2048, %s33, [#allocation6], 128, 128, 8
    $region9: #{tpu_custom_call.1} parent=1 // pred_fallthru
      _
    // Predicated region
    $region10: #{tpu_custom_call.1} parent=1 // pred_check
      _
    $region11: #{tpu_custom_call.1} parent=1 // pred_check_branch
      %40 = sbr.rel (0) target = $region13
    $region12: #{tpu_custom_call.1} parent=1 // pred_region
      %s42 = ssub.s32 2048, 2048
      %43 = vsyncadd [#allocation6], %s42
      %s44 = sshll.u32 [#allocation7], 4
      %s45 = int_to_ptr.vmem [resolvable:$true] %s44
      %50 = dma.hbm_to_vmem [thread:$0]  %s2, 2048, %s45, [#allocation6], 128, 128, 8
    $region13: #{tpu_custom_call.1} parent=1 // pred_fallthru
      _
    // Predicated region
    $region14: #{tpu_custom_call.1} parent=1 // pred_check
      _
    $region15: #{tpu_custom_call.1} parent=1 // pred_check_branch
      %52 = sbr.rel (0) target = $region17
    $region16: #{tpu_custom_call.1} parent=1 // pred_region
      %s54 = ssub.s32 2048, 2048
      %55 = vsyncadd [#allocation9], %s54
      %s56 = sshll.u32 [#allocation8], 4
      %s57 = int_to_ptr.vmem [resolvable:$true] %s56
      %62 = dma.hbm_to_vmem [thread:$0]  %s3, 2048, %s57, [#allocation9], 128, 128, 8
    $region17: #{tpu_custom_call.1} parent=1 // pred_fallthru
      _
    // Predicated region
    $region18: #{tpu_custom_call.1} parent=1 // pred_check
      _
    $region19: #{tpu_custom_call.1} parent=1 // pred_check_branch
      %64 = sbr.rel (0) target = $region21
    $region20: #{tpu_custom_call.1} parent=1 // pred_region
      %s66 = ssub.s32 2048, 2048
      %67 = vsyncadd [#allocation9], %s66
      %s68 = sshll.u32 [#allocation10], 4
      %s69 = int_to_ptr.vmem [resolvable:$true] %s68
      %74 = dma.hbm_to_vmem [thread:$0]  %s4, 2048, %s69, [#allocation9], 128, 128, 8
    $region21: #{tpu_custom_call.1} parent=1 // pred_fallthru
      _
    // Predicated region
    $region22: #{tpu_custom_call.1} parent=1 // pred_check
      _
    $region23: #{tpu_custom_call.1} parent=1 // pred_check_branch
      %76 = sbr.rel (0) target = $region25
    $region24: #{tpu_custom_call.1} parent=1 // pred_region
      _
    $region25: #{tpu_custom_call.1} parent=1 // pred_fallthru
      _
    // Predicated region
    $region26: #{tpu_custom_call.1} parent=1 // pred_check
      _
    $region27: #{tpu_custom_call.1} parent=1 // pred_check_branch
      %78 = sbr.rel (0) target = $region29
    $region28: #{tpu_custom_call.1} parent=1 // pred_region
      _
    $region29: #{tpu_custom_call.1} parent=1 // pred_fallthru
      _
    // Predicated region
    $region30: #{tpu_custom_call.1} parent=1 // pred_check
      _
    $region31: #{tpu_custom_call.1} parent=1 // pred_check_branch
      %80 = sbr.rel (0) target = $region33
    $region32: #{tpu_custom_call.1} parent=1 // pred_region
      _
    $region33: #{tpu_custom_call.1} parent=1 // pred_fallthru
      _
    // Predicated region
    $region34: #{tpu_custom_call.1} parent=1 // pred_check
      _
    $region35: #{tpu_custom_call.1} parent=1 // pred_check_branch
      %82 = sbr.rel (0) target = $region37
    $region36: #{tpu_custom_call.1} parent=1 // pred_region
      %83 = dma.done [#allocation3], 128
    $region37: #{tpu_custom_call.1} parent=1 // pred_fallthru
      _
    // Predicated region
    $region38: #{tpu_custom_call.1} parent=1 // pred_check
      _
    $region39: #{tpu_custom_call.1} parent=1 // pred_check_branch
      %85 = sbr.rel (0) target = $region41
    $region40: #{tpu_custom_call.1} parent=1 // pred_region
      %86 = dma.done [#allocation6], 2048
    $region41: #{tpu_custom_call.1} parent=1 // pred_fallthru
      _
    // Predicated region
    $region42: #{tpu_custom_call.1} parent=1 // pred_check
      _
    $region43: #{tpu_custom_call.1} parent=1 // pred_check_branch
      %88 = sbr.rel (0) target = $region45
    $region44: #{tpu_custom_call.1} parent=1 // pred_region
      %89 = dma.done [#allocation6], 2048
    $region45: #{tpu_custom_call.1} parent=1 // pred_fallthru
      _
    // Predicated region
    $region46: #{tpu_custom_call.1} parent=1 // pred_check
      _
    $region47: #{tpu_custom_call.1} parent=1 // pred_check_branch
      %91 = sbr.rel (0) target = $region49
    $region48: #{tpu_custom_call.1} parent=1 // pred_region
      %92 = dma.done [#allocation9], 2048
    $region49: #{tpu_custom_call.1} parent=1 // pred_fallthru
      _
    // Predicated region
    $region50: #{tpu_custom_call.1} parent=1 // pred_check
      _
    $region51: #{tpu_custom_call.1} parent=1 // pred_check_branch
      %94 = sbr.rel (0) target = $region53
    $region52: #{tpu_custom_call.1} parent=1 // pred_region
      %95 = dma.done [#allocation9], 2048
    $region53: #{tpu_custom_call.1} parent=1 // pred_fallthru
      _
    %v96 = vld [vmem:[#allocation2] sm:$0xff]
    %v97 = vld [vmem:[#allocation5] sm:$0xff]
    %v98 = vld [vmem:[#allocation5 + $0x8] sm:$0xff]
    %v99 = vld [vmem:[#allocation5 + $0x10] sm:$0xff]
    %v100 = vld [vmem:[#allocation5 + $0x18] sm:$0xff]
    %v101 = vld [vmem:[#allocation5 + $0x20] sm:$0xff]
    %v102 = vld [vmem:[#allocation5 + $0x28] sm:$0xff]
    %v103 = vld [vmem:[#allocation5 + $0x30] sm:$0xff]
    %v104 = vld [vmem:[#allocation5 + $0x38] sm:$0xff]
    %v105 = vld [vmem:[#allocation5 + $0x40] sm:$0xff]
    %v106 = vld [vmem:[#allocation5 + $0x48] sm:$0xff]
    %v107 = vld [vmem:[#allocation5 + $0x50] sm:$0xff]
    %v108 = vld [vmem:[#allocation5 + $0x58] sm:$0xff]
    %v109 = vld [vmem:[#allocation5 + $0x60] sm:$0xff]
    %v110 = vld [vmem:[#allocation5 + $0x68] sm:$0xff]
    %v111 = vld [vmem:[#allocation5 + $0x70] sm:$0xff]
    %v112 = vld [vmem:[#allocation5 + $0x78] sm:$0xff]
    %113 = vmatprep.subr.mxu0 0.0
    %114 = vmatpush1.msra.mxu0 %v97
    %115 = vmatprep.subr.mxu0 0.0
    %116 = vmatpush1.msra.mxu0 %v98
    %117 = vmatprep.subr.mxu0 0.0
    %118 = vmatpush1.msra.mxu0 %v99
    %119 = vmatprep.subr.mxu0 0.0
    %120 = vmatpush1.msra.mxu0 %v100
    %121 = vmatprep.subr.mxu0 0.0
    %122 = vmatpush1.msra.mxu0 %v101
    %123 = vmatprep.subr.mxu0 0.0
    %124 = vmatpush1.msra.mxu0 %v102
    %125 = vmatprep.subr.mxu0 0.0
    %126 = vmatpush1.msra.mxu0 %v103
    %127 = vmatprep.subr.mxu0 0.0
    %128 = vmatpush1.msra.mxu0 %v104
    %129 = vmatprep.subr.mxu0 0.0
    %130 = vmatpush1.msra.mxu0 %v105
    %131 = vmatprep.subr.mxu0 0.0
    %132 = vmatpush1.msra.mxu0 %v106
    %133 = vmatprep.subr.mxu0 0.0
    %134 = vmatpush1.msra.mxu0 %v107
    %135 = vmatprep.subr.mxu0 0.0
    %136 = vmatpush1.msra.mxu0 %v108
    %137 = vmatprep.subr.mxu0 0.0
    %138 = vmatpush1.msra.mxu0 %v109
    %139 = vmatprep.subr.mxu0 0.0
    %140 = vmatpush1.msra.mxu0 %v110
    %141 = vmatprep.subr.mxu0 0.0
    %142 = vmatpush1.msra.mxu0 %v111
    %143 = vmatprep.subr.mxu0 0.0
    %144 = vmatpush1.msra.mxu0 %v112
    %145 = vmatprep.subr.mxu0 0.0
    %146 = vmatpush1.msra.mxu0 0.0
    %147 = vmatprep.subr.mxu0 0.0
    %148 = vmatpush1.msra.mxu0 0.0
    %149 = vmatprep.subr.mxu0 0.0
    %150 = vmatpush1.msra.mxu0 0.0
    %151 = vmatprep.subr.mxu0 0.0
    %152 = vmatpush1.msra.mxu0 0.0
    %153 = vmatprep.subr.mxu0 0.0
    %154 = vmatpush1.msra.mxu0 0.0
    %155 = vmatprep.subr.mxu0 0.0
    %156 = vmatpush1.msra.mxu0 0.0
    %157 = vmatprep.subr.mxu0 0.0
    %158 = vmatpush1.msra.mxu0 0.0
    %159 = vmatprep.subr.mxu0 0.0
    %160 = vmatpush1.msra.mxu0 0.0
    %161 = vmatprep.subr.mxu0 0.0
    %162 = vmatpush1.msra.mxu0 0.0
    %163 = vmatprep.subr.mxu0 0.0
    %164 = vmatpush1.msra.mxu0 0.0
    %165 = vmatprep.subr.mxu0 0.0
    %166 = vmatpush1.msra.mxu0 0.0
    %167 = vmatprep.subr.mxu0 0.0
    %168 = vmatpush1.msra.mxu0 0.0
    %169 = vmatprep.subr.mxu0 0.0
    %170 = vmatpush1.msra.mxu0 0.0
    %171 = vmatprep.subr.mxu0 0.0
    %172 = vmatpush1.msra.mxu0 0.0
    %173 = vmatprep.subr.mxu0 0.0
    %174 = vmatpush1.msra.mxu0 0.0
    %175 = vmatprep.subr.mxu0 0.0
    %176 = vmatpush1.msra.mxu0 0.0
    %177 = vmatprep.mubr.f32.mxu0 0.0
    %178 = vmatmul.mubr.f32.gmra.mrb[0].mxu0 %v96
    %v179 = vpop.f32.mrb[0].mxu0
    %v180 = vadd.f32 0.0, %v179
    %v181 = vpop.f32.mrb[0].mxu0
    %182 = vdwg.mxu0
    %v183 = vld [vmem:[%s5] sm:$0x1]
    %v184 = vmax.f32 %v180, 0.0
    %v186 = vlaneseq
    %v187 = vshrl.u32 %v186, 7
    %v188 = vsub.s32 0, %v187
    %v189 = vrot.slane %v183, %v188
    %v191 = vmul.f32 %v189, %v184
    %v192 = vld [vmem:[#allocation7] sm:$0xff]
    %v193 = vld [vmem:[#allocation7 + $0x8] sm:$0xff]
    %v194 = vld [vmem:[#allocation7 + $0x10] sm:$0xff]
    %v195 = vld [vmem:[#allocation7 + $0x18] sm:$0xff]
    %v196 = vld [vmem:[#allocation7 + $0x20] sm:$0xff]
    %v197 = vld [vmem:[#allocation7 + $0x28] sm:$0xff]
    %v198 = vld [vmem:[#allocation7 + $0x30] sm:$0xff]
    %v199 = vld [vmem:[#allocation7 + $0x38] sm:$0xff]
    %v200 = vld [vmem:[#allocation7 + $0x40] sm:$0xff]
    %v201 = vld [vmem:[#allocation7 + $0x48] sm:$0xff]
    %v202 = vld [vmem:[#allocation7 + $0x50] sm:$0xff]
    %v203 = vld [vmem:[#allocation7 + $0x58] sm:$0xff]
    %v204 = vld [vmem:[#allocation7 + $0x60] sm:$0xff]
    %v205 = vld [vmem:[#allocation7 + $0x68] sm:$0xff]
    %v206 = vld [vmem:[#allocation7 + $0x70] sm:$0xff]
    %v207 = vld [vmem:[#allocation7 + $0x78] sm:$0xff]
    %208 = vmatprep.subr.mxu0 0.0
    %209 = vmatpush1.msra.mxu0 %v192
    %210 = vmatprep.subr.mxu0 0.0
    %211 = vmatpush1.msra.mxu0 %v193
    %212 = vmatprep.subr.mxu0 0.0
    %213 = vmatpush1.msra.mxu0 %v194
    %214 = vmatprep.subr.mxu0 0.0
    %215 = vmatpush1.msra.mxu0 %v195
    %216 = vmatprep.subr.mxu0 0.0
    %217 = vmatpush1.msra.mxu0 %v196
    %218 = vmatprep.subr.mxu0 0.0
    %219 = vmatpush1.msra.mxu0 %v197
    %220 = vmatprep.subr.mxu0 0.0
    %221 = vmatpush1.msra.mxu0 %v198
    %222 = vmatprep.subr.mxu0 0.0
    %223 = vmatpush1.msra.mxu0 %v199
    %224 = vmatprep.subr.mxu0 0.0
    %225 = vmatpush1.msra.mxu0 %v200
    %226 = vmatprep.subr.mxu0 0.0
    %227 = vmatpush1.msra.mxu0 %v201
    %228 = vmatprep.subr.mxu0 0.0
    %229 = vmatpush1.msra.mxu0 %v202
    %230 = vmatprep.subr.mxu0 0.0
    %231 = vmatpush1.msra.mxu0 %v203
    %232 = vmatprep.subr.mxu0 0.0
    %233 = vmatpush1.msra.mxu0 %v204
    %234 = vmatprep.subr.mxu0 0.0
    %235 = vmatpush1.msra.mxu0 %v205
    %236 = vmatprep.subr.mxu0 0.0
    %237 = vmatpush1.msra.mxu0 %v206
    %238 = vmatprep.subr.mxu0 0.0
    %239 = vmatpush1.msra.mxu0 %v207
    %240 = vmatprep.subr.mxu0 0.0
    %241 = vmatpush1.msra.mxu0 0.0
    %242 = vmatprep.subr.mxu0 0.0
    %243 = vmatpush1.msra.mxu0 0.0
    %244 = vmatprep.subr.mxu0 0.0
    %245 = vmatpush1.msra.mxu0 0.0
    %246 = vmatprep.subr.mxu0 0.0
    %247 = vmatpush1.msra.mxu0 0.0
    %248 = vmatprep.subr.mxu0 0.0
    %249 = vmatpush1.msra.mxu0 0.0
    %250 = vmatprep.subr.mxu0 0.0
    %251 = vmatpush1.msra.mxu0 0.0
    %252 = vmatprep.subr.mxu0 0.0
    %253 = vmatpush1.msra.mxu0 0.0
    %254 = vmatprep.subr.mxu0 0.0
    %255 = vmatpush1.msra.mxu0 0.0
    %256 = vmatprep.subr.mxu0 0.0
    %257 = vmatpush1.msra.mxu0 0.0
    %258 = vmatprep.subr.mxu0 0.0
    %259 = vmatpush1.msra.mxu0 0.0
    %260 = vmatprep.subr.mxu0 0.0
    %261 = vmatpush1.msra.mxu0 0.0
    %262 = vmatprep.subr.mxu0 0.0
    %263 = vmatpush1.msra.mxu0 0.0
    %264 = vmatprep.subr.mxu0 0.0
    %265 = vmatpush1.msra.mxu0 0.0
    %266 = vmatprep.subr.mxu0 0.0
    %267 = vmatpush1.msra.mxu0 0.0
    %268 = vmatprep.subr.mxu0 0.0
    %269 = vmatpush1.msra.mxu0 0.0
    %270 = vmatprep.subr.mxu0 0.0
    %271 = vmatpush1.msra.mxu0 0.0
    %272 = vmatprep.mubr.f32.mxu0 0.0
    %273 = vmatmul.mubr.f32.gmra.mrb[0].mxu0 %v191
    %v274 = vpop.f32.mrb[0].mxu0
    %v275 = vadd.f32 0.0, %v274
    %v276 = vpop.f32.mrb[0].mxu0
    %277 = vdwg.mxu0
    %v278 = vld [vmem:[%s6] sm:$0x1]
    %v279 = vmax.f32 %v275, 0.0
    %v281 = vlaneseq
    %v282 = vshrl.u32 %v281, 7
    %v283 = vsub.s32 0, %v282
    %v284 = vrot.slane %v278, %v283
    %v286 = vmul.f32 %v284, %v279
    %v287 = vld [vmem:[#allocation8] sm:$0xff]
    %v288 = vld [vmem:[#allocation8 + $0x8] sm:$0xff]
    %v289 = vld [vmem:[#allocation8 + $0x10] sm:$0xff]
    %v290 = vld [vmem:[#allocation8 + $0x18] sm:$0xff]
    %v291 = vld [vmem:[#allocation8 + $0x20] sm:$0xff]
    %v292 = vld [vmem:[#allocation8 + $0x28] sm:$0xff]
    %v293 = vld [vmem:[#allocation8 + $0x30] sm:$0xff]
    %v294 = vld [vmem:[#allocation8 + $0x38] sm:$0xff]
    %v295 = vld [vmem:[#allocation8 + $0x40] sm:$0xff]
    %v296 = vld [vmem:[#allocation8 + $0x48] sm:$0xff]
    %v297 = vld [vmem:[#allocation8 + $0x50] sm:$0xff]
    %v298 = vld [vmem:[#allocation8 + $0x58] sm:$0xff]
    %v299 = vld [vmem:[#allocation8 + $0x60] sm:$0xff]
    %v300 = vld [vmem:[#allocation8 + $0x68] sm:$0xff]
    %v301 = vld [vmem:[#allocation8 + $0x70] sm:$0xff]
    %v302 = vld [vmem:[#allocation8 + $0x78] sm:$0xff]
    %303 = vmatprep.subr.mxu0 0.0
    %304 = vmatpush1.msra.mxu0 %v287
    %305 = vmatprep.subr.mxu0 0.0
    %306 = vmatpush1.msra.mxu0 %v288
    %307 = vmatprep.subr.mxu0 0.0
    %308 = vmatpush1.msra.mxu0 %v289
    %309 = vmatprep.subr.mxu0 0.0
    %310 = vmatpush1.msra.mxu0 %v290
    %311 = vmatprep.subr.mxu0 0.0
    %312 = vmatpush1.msra.mxu0 %v291
    %313 = vmatprep.subr.mxu0 0.0
    %314 = vmatpush1.msra.mxu0 %v292
    %315 = vmatprep.subr.mxu0 0.0
    %316 = vmatpush1.msra.mxu0 %v293
    %317 = vmatprep.subr.mxu0 0.0
    %318 = vmatpush1.msra.mxu0 %v294
    %319 = vmatprep.subr.mxu0 0.0
    %320 = vmatpush1.msra.mxu0 %v295
    %321 = vmatprep.subr.mxu0 0.0
    %322 = vmatpush1.msra.mxu0 %v296
    %323 = vmatprep.subr.mxu0 0.0
    %324 = vmatpush1.msra.mxu0 %v297
    %325 = vmatprep.subr.mxu0 0.0
    %326 = vmatpush1.msra.mxu0 %v298
    %327 = vmatprep.subr.mxu0 0.0
    %328 = vmatpush1.msra.mxu0 %v299
    %329 = vmatprep.subr.mxu0 0.0
    %330 = vmatpush1.msra.mxu0 %v300
    %331 = vmatprep.subr.mxu0 0.0
    %332 = vmatpush1.msra.mxu0 %v301
    %333 = vmatprep.subr.mxu0 0.0
    %334 = vmatpush1.msra.mxu0 %v302
    %335 = vmatprep.subr.mxu0 0.0
    %336 = vmatpush1.msra.mxu0 0.0
    %337 = vmatprep.subr.mxu0 0.0
    %338 = vmatpush1.msra.mxu0 0.0
    %339 = vmatprep.subr.mxu0 0.0
    %340 = vmatpush1.msra.mxu0 0.0
    %341 = vmatprep.subr.mxu0 0.0
    %342 = vmatpush1.msra.mxu0 0.0
    %343 = vmatprep.subr.mxu0 0.0
    %344 = vmatpush1.msra.mxu0 0.0
    %345 = vmatprep.subr.mxu0 0.0
    %346 = vmatpush1.msra.mxu0 0.0
    %347 = vmatprep.subr.mxu0 0.0
    %348 = vmatpush1.msra.mxu0 0.0
    %349 = vmatprep.subr.mxu0 0.0
    %350 = vmatpush1.msra.mxu0 0.0
    %351 = vmatprep.subr.mxu0 0.0
    %352 = vmatpush1.msra.mxu0 0.0
    %353 = vmatprep.subr.mxu0 0.0
    %354 = vmatpush1.msra.mxu0 0.0
    %355 = vmatprep.subr.mxu0 0.0
    %356 = vmatpush1.msra.mxu0 0.0
    %357 = vmatprep.subr.mxu0 0.0
    %358 = vmatpush1.msra.mxu0 0.0
    %359 = vmatprep.subr.mxu0 0.0
    %360 = vmatpush1.msra.mxu0 0.0
    %361 = vmatprep.subr.mxu0 0.0
    %362 = vmatpush1.msra.mxu0 0.0
    %363 = vmatprep.subr.mxu0 0.0
    %364 = vmatpush1.msra.mxu0 0.0
    %365 = vmatprep.subr.mxu0 0.0
    %366 = vmatpush1.msra.mxu0 0.0
    %367 = vmatprep.mubr.f32.mxu0 0.0
    %368 = vmatmul.mubr.f32.gmra.mrb[0].mxu0 %v286
    %v369 = vpop.f32.mrb[0].mxu0
    %v370 = vadd.f32 0.0, %v369
    %v371 = vpop.f32.mrb[0].mxu0
    %372 = vdwg.mxu0
    %v373 = vld [vmem:[%s7] sm:$0x1]
    %v374 = vmax.f32 %v370, 0.0
    %v376 = vlaneseq
    %v377 = vshrl.u32 %v376, 7
    %v378 = vsub.s32 0, %v377
    %v379 = vrot.slane %v373, %v378
    %v381 = vmul.f32 %v379, %v374
    %v382 = vld [vmem:[#allocation10] sm:$0xff]
    %v383 = vld [vmem:[#allocation10 + $0x8] sm:$0xff]
    %v384 = vld [vmem:[#allocation10 + $0x10] sm:$0xff]
    %v385 = vld [vmem:[#allocation10 + $0x18] sm:$0xff]
    %v386 = vld [vmem:[#allocation10 + $0x20] sm:$0xff]
    %v387 = vld [vmem:[#allocation10 + $0x28] sm:$0xff]
    %v388 = vld [vmem:[#allocation10 + $0x30] sm:$0xff]
    %v389 = vld [vmem:[#allocation10 + $0x38] sm:$0xff]
    %v390 = vld [vmem:[#allocation10 + $0x40] sm:$0xff]
    %v391 = vld [vmem:[#allocation10 + $0x48] sm:$0xff]
    %v392 = vld [vmem:[#allocation10 + $0x50] sm:$0xff]
    %v393 = vld [vmem:[#allocation10 + $0x58] sm:$0xff]
    %v394 = vld [vmem:[#allocation10 + $0x60] sm:$0xff]
    %v395 = vld [vmem:[#allocation10 + $0x68] sm:$0xff]
    %v396 = vld [vmem:[#allocation10 + $0x70] sm:$0xff]
    %v397 = vld [vmem:[#allocation10 + $0x78] sm:$0xff]
    %398 = vmatprep.subr.mxu0 0.0
    %399 = vmatpush1.msra.mxu0 %v382
    %400 = vmatprep.subr.mxu0 0.0
    %401 = vmatpush1.msra.mxu0 %v383
    %402 = vmatprep.subr.mxu0 0.0
    %403 = vmatpush1.msra.mxu0 %v384
    %404 = vmatprep.subr.mxu0 0.0
    %405 = vmatpush1.msra.mxu0 %v385
    %406 = vmatprep.subr.mxu0 0.0
    %407 = vmatpush1.msra.mxu0 %v386
    %408 = vmatprep.subr.mxu0 0.0
    %409 = vmatpush1.msra.mxu0 %v387
    %410 = vmatprep.subr.mxu0 0.0
    %411 = vmatpush1.msra.mxu0 %v388
    %412 = vmatprep.subr.mxu0 0.0
    %413 = vmatpush1.msra.mxu0 %v389
    %414 = vmatprep.subr.mxu0 0.0
    %415 = vmatpush1.msra.mxu0 %v390
    %416 = vmatprep.subr.mxu0 0.0
    %417 = vmatpush1.msra.mxu0 %v391
    %418 = vmatprep.subr.mxu0 0.0
    %419 = vmatpush1.msra.mxu0 %v392
    %420 = vmatprep.subr.mxu0 0.0
    %421 = vmatpush1.msra.mxu0 %v393
    %422 = vmatprep.subr.mxu0 0.0
    %423 = vmatpush1.msra.mxu0 %v394
    %424 = vmatprep.subr.mxu0 0.0
    %425 = vmatpush1.msra.mxu0 %v395
    %426 = vmatprep.subr.mxu0 0.0
    %427 = vmatpush1.msra.mxu0 %v396
    %428 = vmatprep.subr.mxu0 0.0
    %429 = vmatpush1.msra.mxu0 %v397
    %430 = vmatprep.subr.mxu0 0.0
    %431 = vmatpush1.msra.mxu0 0.0
    %432 = vmatprep.subr.mxu0 0.0
    %433 = vmatpush1.msra.mxu0 0.0
    %434 = vmatprep.subr.mxu0 0.0
    %435 = vmatpush1.msra.mxu0 0.0
    %436 = vmatprep.subr.mxu0 0.0
    %437 = vmatpush1.msra.mxu0 0.0
    %438 = vmatprep.subr.mxu0 0.0
    %439 = vmatpush1.msra.mxu0 0.0
    %440 = vmatprep.subr.mxu0 0.0
    %441 = vmatpush1.msra.mxu0 0.0
    %442 = vmatprep.subr.mxu0 0.0
    %443 = vmatpush1.msra.mxu0 0.0
    %444 = vmatprep.subr.mxu0 0.0
    %445 = vmatpush1.msra.mxu0 0.0
    %446 = vmatprep.subr.mxu0 0.0
    %447 = vmatpush1.msra.mxu0 0.0
    %448 = vmatprep.subr.mxu0 0.0
    %449 = vmatpush1.msra.mxu0 0.0
    %450 = vmatprep.subr.mxu0 0.0
    %451 = vmatpush1.msra.mxu0 0.0
    %452 = vmatprep.subr.mxu0 0.0
    %453 = vmatpush1.msra.mxu0 0.0
    %454 = vmatprep.subr.mxu0 0.0
    %455 = vmatpush1.msra.mxu0 0.0
    %456 = vmatprep.subr.mxu0 0.0
    %457 = vmatpush1.msra.mxu0 0.0
    %458 = vmatprep.subr.mxu0 0.0
    %459 = vmatpush1.msra.mxu0 0.0
    %460 = vmatprep.subr.mxu0 0.0
    %461 = vmatpush1.msra.mxu0 0.0
    %462 = vmatprep.mubr.f32.mxu0 0.0
    %463 = vmatmul.mubr.f32.gmra.mrb[0].mxu0 %v381
    %v464 = vpop.f32.mrb[0].mxu0
    %v465 = vadd.f32 0.0, %v464
    %v466 = vpop.f32.mrb[0].mxu0
    %467 = vdwg.mxu0
    %468 = vst [vmem:[#allocation11] sm:$0xff] %v465
    // Predicated region
    $region54: #{tpu_custom_call.1} parent=1 // pred_check
      _
    $region55: #{tpu_custom_call.1} parent=1 // pred_check_branch
      %470 = sbr.rel (0) target = $region57
    $region56: #{tpu_custom_call.1} parent=1 // pred_region
      %s472 = ssub.s32 128, 128
      %473 = vsyncadd [#allocation4], %s472
      %s475 = sshll.u32 [#allocation11], 4
      %s476 = int_to_ptr.vmem [resolvable:$true] %s475
      %478 = dma.vmem_to_hbm [thread:$0]  %s476, 128, %s8, [#allocation4]
    $region57: #{tpu_custom_call.1} parent=1 // pred_fallthru
      _
    // Predicated region
    $region58: #{tpu_custom_call.1} parent=1 // pred_check
      _
    $region59: #{tpu_custom_call.1} parent=1 // pred_check_branch
      %480 = sbr.rel (0) target = $region61
    $region60: #{tpu_custom_call.1} parent=1 // pred_region
      %481 = dma.done [#allocation4], 128
    $region61: #{tpu_custom_call.1} parent=1 // pred_fallthru
      _
    %482 = vsyncpa [#allocation3], 1
    %483 = vsyncpa [#allocation6], 1
    %484 = vsyncpa [#allocation9], 1
    %485 = vsyncpa [#allocation4], 1

</llo_original>
